<compile_context>
chip_gen: v6e
topology: v6e:2x2x1
jax: 0.10.0
libtpu: 0.0.40
codegen_flags: <defaults>
</compile_context>

<pallas_src>
import functools

import jax
import jax.numpy as jnp
from jax.experimental import pallas as pl
from jax.experimental.pallas import tpu as pltpu


def _compute_tf_same_pad(ksize: int, stride: int, h: int):
    """Replicates the pad math of TFSamepaddingLayer.forward (uses H only)."""
    if h % stride == 0:
        pad = max(ksize - stride, 0)
    else:
        pad = max(ksize - h % stride, 0)
    if pad % 2 == 0:
        pad_start = pad // 2
        pad_end = pad // 2
    else:
        pad_start = pad // 2
        pad_end = pad - pad_start
    return pad_start, pad_end


def _round_up(v: int, m: int) -> int:
    return -(-v // m) * m


# >= ~4 grid steps per TensorCore on v7x (2 TCs) -> real prefetch/writeback overlap.
_MIN_GRID_STEPS = 8
# Conservative fallback = smallest per-core VMEM (v7x 64 MiB); v5e/v6e have 128 MiB.
_DEFAULT_PHYS_VMEM = 64 << 20


def _vmem_plan():
    """Return (block_budget_bytes, vmem_limit_bytes), safe on v5e/v6e/v7x."""
    phys = _DEFAULT_PHYS_VMEM
    try:
        phys = int(getattr(pltpu.get_tpu_info(), "vmem_capacity_bytes", phys)) or phys
    except Exception:
        pass
    phys = max(phys, 32 << 20)
    # Budget for the TOTAL double-buffered (input + output) block footprint,
    # measured in true layout-padded bytes.  ~21 MiB on v7x, 24 MiB on v5e/v6e.
    block_budget = max(2 << 20, min(phys // 3, 24 << 20))
    # Scoped VMEM limit with headroom; 32 MiB on v7x, 48 MiB on v5e/v6e —
    # always well below physical VMEM.
    vmem_limit = min(phys // 2, 48 << 20)
    return block_budget, int(vmem_limit)


def _choose_leading_block(nc: int, h: int, w: int, hp: int, wp: int,
                          itemsize: int, block_budget: int) -> int:
    """Largest leading-dim block whose TRUE VMEM footprint fits the budget.

    VMEM tiles the last two dims to (8, 128), so bytes-per-leading-row are
    computed from the rounded-up dims for both the input (h, w) and output
    (hp, wp) blocks, times 2 for the double-buffered pipeline.  Also keeps
    >= _MIN_GRID_STEPS grid steps when nc allows, so each TensorCore sees a
    deep enough pipeline on v7x.
    """
    in_row = _round_up(h, 8) * _round_up(w, 128) * itemsize
    out_row = _round_up(hp, 8) * _round_up(wp, 128) * itemsize
    per_row = 2 * (in_row + out_row)
    budget_cap = max(1, block_budget // per_row)
    pipeline_cap = max(1, nc // _MIN_GRID_STEPS)
    return int(max(1, min(budget_cap, pipeline_cap, nc)))


def _pad_kernel(x_ref, o_ref, *, ps: int, pe: int):
    """Assemble the padded tile in vregs, then issue ONE full-block store."""
    blk, h, w = x_ref.shape
    _, hp, wp = o_ref.shape
    dt = o_ref.dtype
    x = x_ref[...]

    # Pad along W (lane axis): XLU lane shifts, which have slack; the store
    # stays full width.
    parts = []
    if ps > 0:
        parts.append(jnp.zeros((blk, h, ps), dt))
    parts.append(x)
    if pe > 0:
        parts.append(jnp.zeros((blk, h, pe), dt))
    rows = jnp.concatenate(parts, axis=2) if len(parts) > 1 else x  # (blk, h, wp)

    # Pad along H (sublane axis): cheap row stacking.
    parts = []
    if ps > 0:
        parts.append(jnp.zeros((blk, ps, wp), dt))
    parts.append(rows)
    if pe > 0:
        parts.append(jnp.zeros((blk, pe, wp), dt))
    padded = jnp.concatenate(parts, axis=1) if len(parts) > 1 else rows  # (blk, hp, wp)

    # Single contiguous, full-lane-width store; every element written exactly once.
    o_ref[...] = padded


def tf_same_padding(x: jax.Array, ksize: int, stride: int) -> jax.Array:
    """TF 'same' padding of an NCHW tensor via a Pallas TPU kernel."""
    n, c, h, w = x.shape
    ps, pe = _compute_tf_same_pad(ksize, stride, h)
    if ps == 0 and pe == 0:
        # No-op pad: skip the kernel (saves a full HBM round trip).
        return x

    hp = h + ps + pe
    wp = w + ps + pe
    nc = n * c
    itemsize = jnp.dtype(x.dtype).itemsize

    # Collapse N and C into one leading axis (free reshape) and tile it.
    x2 = x.reshape(nc, h, w)
    block_budget, vmem_limit = _vmem_plan()
    blk = _choose_leading_block(nc, h, w, hp, wp, itemsize, block_budget)
    # Partial last leading block is fine: Pallas masks the out-of-range
    # leading rows on writeback (no hand-rolled indexing -> no OOB risk).
    grid = (pl.cdiv(nc, blk),)

    kernel = functools.partial(_pad_kernel, ps=ps, pe=pe)
    out_nbytes = nc * hp * wp * itemsize

    out = pl.pallas_call(
        kernel,
        out_shape=jax.ShapeDtypeStruct((nc, hp, wp), x.dtype),
        grid=grid,
        in_specs=[
            # Last two block dims equal the full array dims -> layout-legal.
            pl.BlockSpec((blk, h, w), lambda i: (i, 0, 0)),
        ],
        out_specs=pl.BlockSpec((blk, hp, wp), lambda i: (i, 0, 0)),
        compiler_params=pltpu.CompilerParams(
            dimension_semantics=("parallel",),
            vmem_limit_bytes=vmem_limit,
        ),
        cost_estimate=pl.CostEstimate(
            flops=0,
            transcendentals=0,
            bytes_accessed=x.nbytes + out_nbytes,
        ),
    )(x2)

    return out.reshape(n, c, hp, wp)


if __name__ == "__main__":
    key = jax.random.PRNGKey(0)
    N, C, H, W = 2, 4, 16, 16
    x = jax.random.normal(key, (N, C, H, W), dtype=jnp.float32)

    # Typical HoVer-Net usage: ksize=3, stride=1 -> symmetric pad of 1 per side.
    ksize, stride = 3, 1
    out = jax.block_until_ready(tf_same_padding(x, ksize, stride))
    ps, pe = _compute_tf_same_pad(ksize, stride, H)
    ref = jnp.pad(x, ((0, 0), (0, 0), (ps, pe), (ps, pe)))
    assert out.shape == ref.shape, (out.shape, ref.shape)
    assert out.dtype == x.dtype
    assert jnp.array_equal(out, ref)

    # Asymmetric pad path: ksize=4, stride=1 -> pad=3 -> (1, 2) per axis.
    ksize2, stride2 = 4, 1
    out2 = jax.block_until_ready(tf_same_padding(x, ksize2, stride2))
    ps2, pe2 = _compute_tf_same_pad(ksize2, stride2, H)
    ref2 = jnp.pad(x, ((0, 0), (0, 0), (ps2, pe2), (ps2, pe2)))
    assert out2.shape == ref2.shape, (out2.shape, ref2.shape)
    assert jnp.array_equal(out2, ref2)

    # Partial-last-block path: odd leading extent (N*C = 2*3 = 6 with blk=1,
    # exercises the cdiv grid; also checks a non-square-friendly channel count).
    x3 = jax.random.normal(key, (2, 3, 16, 16), dtype=jnp.float32)
    out3 = jax.block_until_ready(tf_same_padding(x3, 3, 1))
    ref3 = jnp.pad(x3, ((0, 0), (0, 0), (1, 1), (1, 1)))
    assert jnp.array_equal(out3, ref3)

    # No-op pad path (ksize <= stride): returns the input without a kernel.
    out4 = jax.block_until_ready(tf_same_padding(x, 1, 1))
    assert jnp.array_equal(out4, x)

    print("KERNEL_OK")
</pallas_src>

<mosaic_0001>
module attributes {stable_mosaic.version = 11 : i64} {
  func.func @_pad_kernel(%arg0: i32, %arg1: memref<1x16x16xf32, #tpu.memory_space<vmem>>, %arg2: memref<1x18x18xf32, #tpu.memory_space<vmem>>) attributes {dimension_semantics = [#tpu.dimension_semantics<parallel>], iteration_bounds = array<i64: 8>, scalar_prefetch = 0 : i64, scratch_operands = 0 : i64, tpu.core_type = #tpu.core_type<tc>, window_params = [{transform_indices = @transform_0, window_bounds = array<i64: 1, 16, 16>}, {transform_indices = @transform_1, window_bounds = array<i64: 1, 18, 18>}]} {
    %c0 = arith.constant 0 : index
    %c0_0 = arith.constant 0 : index
    %c0_1 = arith.constant 0 : index
    %0 = vector.load %arg1[%c0, %c0_0, %c0_1] : memref<1x16x16xf32, #tpu.memory_space<vmem>>, vector<1x16x16xf32>
    %cst = arith.constant 0.000000e+00 : f32
    %1 = vector.broadcast %cst : f32 to vector<1x16x1xf32>
    %cst_2 = arith.constant 0.000000e+00 : f32
    %2 = vector.broadcast %cst_2 : f32 to vector<1x16x1xf32>
    %3 = tpu.concatenate %1, %0, %2 in 2 : vector<1x16x1xf32>, vector<1x16x16xf32>, vector<1x16x1xf32> -> vector<1x16x18xf32>
    %cst_3 = arith.constant 0.000000e+00 : f32
    %4 = vector.broadcast %cst_3 : f32 to vector<1x1x18xf32>
    %cst_4 = arith.constant 0.000000e+00 : f32
    %5 = vector.broadcast %cst_4 : f32 to vector<1x1x18xf32>
    %6 = tpu.concatenate %4, %3, %5 in 1 : vector<1x1x18xf32>, vector<1x16x18xf32>, vector<1x1x18xf32> -> vector<1x18x18xf32>
    %c0_5 = arith.constant 0 : index
    %c0_6 = arith.constant 0 : index
    %c0_7 = arith.constant 0 : index
    %7 = vector.load %arg2[%c0_5, %c0_6, %c0_7] : memref<1x18x18xf32, #tpu.memory_space<vmem>>, vector<1x18x18xf32>
    tpu.vector_store %arg2[%c0_5, %c0_6, %c0_7], %6 {strides = array<i32>} : memref<1x18x18xf32, #tpu.memory_space<vmem>>, vector<1x18x18xf32>,
    return
  }
  func.func @transform_0(%arg0: i32) -> (i32, i32, i32) {
    %c0_i32 = arith.constant 0 : i32
    %c0_i32_0 = arith.constant 0 : i32
    %c0_i32_1 = arith.constant 0 : i32
    return %arg0, %c0_i32, %c0_i32_0 : i32, i32, i32
  }
  func.func @transform_1(%arg0: i32) -> (i32, i32, i32) {
    %c0_i32 = arith.constant 0 : i32
    %c0_i32_0 = arith.constant 0 : i32
    %c0_i32_1 = arith.constant 0 : i32
    return %arg0, %c0_i32, %c0_i32_0 : i32, i32, i32
  }
}

</mosaic_0001>

<llo_original>
// kernel: tpu_custom_call.1
$region0: #{tpu_custom_call.1}
  #allocation0 [shape = 'u32[]', space=smem, size = 0x4, offset = 0x4, fixed_abs, tag = 'smem constant byte address 0x4 - core index']
  #allocation1 [shape = 'u32[144,128]{1,0:T(1,128)}', space=vmem, size = 0x12000, scoped, tag = 'internal scratch']
  %s0 = inlined_call_operand.hbm [shape: f32[8,16,16], index: 0, kind: input, shape index: {}]
  %s1 = inlined_call_operand.vmem [shape: f32[8,18,18], index: 1, kind: output, shape index: {}]
  %s2 = sld [smem:[#allocation0]]
  $region41: #{tpu_custom_call.1} parent=0
    _
  %s4 = ssub.s32 1, %s2
  %s5 = scalar_select 0, %s4, %s2
  $region1: #{tpu_custom_call.1} parent=0
    #allocation2 [shape = 'u8[16384]{0}', space=vmem, size = 0x4000, scoped, tag = 'input window, operand 0']
    #allocation3 [shape = 's32[2]{0}', space=sflag, size = 0x8, scoped, tag = 'scoped memory for tpu_custom_call.1']
    %6 = vsyncpa [#allocation3], 0
    %s7 = scalar_lea.sflag [#allocation3], 1
    %8 = vsyncpa %s7, 0
    loop: start=0, step=1, limit=10
    $region2: #{tpu_custom_call.1} parent=1 // loop_pre_header
      _
    $region3: #{tpu_custom_call.1} parent=1 // loop_header
      %s10 = sphi 0, %s14
      %p11 = scmp.ge.s32.totalorder %s10, 10
      %s20 = sphi 0, %s22
      %s23 = sphi 0, %s20
      %s24 = sphi 0, %s23
      %s40 = sphi 0, %s24
      %s46 = sphi 0, %s48
      %s49 = sphi 0, %s46
      %s50 = sphi 0, %s49
      %s66 = sphi 0, %s50
    $region4: #{tpu_custom_call.1} parent=1 // loop_header_branch
      %13 = sbr.rel (%p11) target = $region8
    $region5: #{tpu_custom_call.1} parent=1 // loop_body
      %s15 = ssub.s32 %s10, 1
      %s16 = ssub.s32 %s10, 2
      %s17 = sadd.s32 %s10, 1
      %s18 = ssub.s32 %s10, %s17
      %p19 = scmp.eq.s32.totalorder %s18, 0
      %s21 = sadd.s32 %s20, 1
      %s22 = scalar_select %p19, %s20, %s21
      %p25 = pneg %p19
      %p26 = scmp.eq.s32.totalorder %s10, 7
      %p27 = por %p25, %p26
      %p28 = scmp.ne.s32.totalorder %s20, %s23
      %p29 = scmp.eq.s32.totalorder %s10, 0
      %p30 = por %p28, %p29
      %p31 = scmp.ne.s32.totalorder %s20, %s23
      %p32 = scmp.eq.s32.totalorder %s15, 7
      %p33 = por %p31, %p32
      %p34 = scmp.ne.s32.totalorder %s23, %s24
      %p35 = scmp.eq.s32.totalorder %s15, 0
      %p36 = por %p34, %p35
      %p37 = scmp.ne.s32.totalorder %s23, %s24
      %p38 = scmp.eq.s32.totalorder %s16, 7
      %p39 = por %p37, %p38
      %p41 = scmp.ne.s32.totalorder %s24, %s40
      %p42 = scmp.eq.s32.totalorder %s16, 0
      %p43 = por %p41, %p42
      %s44 = ssub.s32 %s10, %s17
      %p45 = scmp.eq.s32.totalorder %s44, 0
      %s47 = sadd.s32 %s46, 1
      %s48 = scalar_select %p45, %s46, %s47
      %p51 = pneg %p45
      %p52 = scmp.eq.s32.totalorder %s10, 7
      %p53 = por %p51, %p52
      %p54 = scmp.ne.s32.totalorder %s46, %s49
      %p55 = scmp.eq.s32.totalorder %s10, 0
      %p56 = por %p54, %p55
      %p57 = scmp.ne.s32.totalorder %s46, %s49
      %p58 = scmp.eq.s32.totalorder %s15, 7
      %p59 = por %p57, %p58
      %p60 = scmp.ne.s32.totalorder %s49, %s50
      %p61 = scmp.eq.s32.totalorder %s15, 0
      %p62 = por %p60, %p61
      %p63 = scmp.ne.s32.totalorder %s49, %s50
      %p64 = scmp.eq.s32.totalorder %s16, 7
      %p65 = por %p63, %p64
      %p67 = scmp.ne.s32.totalorder %s50, %s66
      %p68 = scmp.eq.s32.totalorder %s16, 0
      %p69 = por %p67, %p68
      %p70 = scmp.le.s32.totalorder 1, %s10
      %p71 = scmp.lt.s32.totalorder %s10, 9
      %p72 = pnand %p70, %p71
      %p73 = pneg %p72
      // Predicated region
      $region9: #{tpu_custom_call.1} parent=5 // pred_check
        _
      $region10: #{tpu_custom_call.1} parent=5 // pred_check_branch
        %75 = sbr.rel (%p72) target = $region12
      $region11: #{tpu_custom_call.1} parent=5 // pred_region
        %s76 = ssub.s32 %s10, 1
      $region12: #{tpu_custom_call.1} parent=5 // pred_fallthru
        _
      %p77 = scmp.lt.s32.totalorder %s10, 8
      // Predicated region
      $region13: #{tpu_custom_call.1} parent=5 // pred_check
        %p78 = pneg %p77
      $region14: #{tpu_custom_call.1} parent=5 // pred_check_branch
        %80 = sbr.rel (%p78) target = $region16
      $region15: #{tpu_custom_call.1} parent=5 // pred_region
        // Predicated region
        $region17: #{tpu_custom_call.1} parent=15 // pred_check
          %p81 = pneg %p30
        $region18: #{tpu_custom_call.1} parent=15 // pred_check_branch
          %83 = sbr.rel (%p81) target = $region20
        $region19: #{tpu_custom_call.1} parent=15 // pred_region
          %s84 = sand.u32 %s20, 1
          %s85 = scalar_lea.sflag [#allocation3], %s84
          %s86 = sand.u32 %s20, 1
          %s87 = smul.addr %s86, 16
          %s88 = scalar_lea.vmem [#allocation2], %s87
          %s90 = ssub.s32 256, 256
          %91 = vsyncadd %s85, %s90
          %s92 = smul.addr %s10, 2
          %s93 = smul.addr %s92, 128
          %s94 = scalar_lea.hbm %s0, %s93
          %s95 = sshll.u32 %s88, 4
          %s96 = int_to_ptr.vmem [resolvable:$true] %s95
          %101 = dma.hbm_to_vmem [thread:$0]  %s94, 256, %s96, %s85, 128, 128, 8
        $region20: #{tpu_custom_call.1} parent=15 // pred_fallthru
          _
      $region16: #{tpu_custom_call.1} parent=5 // pred_fallthru
        _
      %p102 = scmp.le.s32.totalorder 1, %s10
      %p103 = scmp.lt.s32.totalorder %s10, 9
      %p104 = pnand %p102, %p103
      %p105 = pneg %p104
      // Predicated region
      $region21: #{tpu_custom_call.1} parent=5 // pred_check
        _
      $region22: #{tpu_custom_call.1} parent=5 // pred_check_branch
        %107 = sbr.rel (%p104) target = $region24
      $region23: #{tpu_custom_call.1} parent=5 // pred_region
        %s108 = ssub.s32 %s10, 1
        %s109 = sand.u32 %s23, 1
        %s110 = scalar_lea.sflag [#allocation3], %s109
        %s111 = sand.u32 %s23, 1
        %s112 = smul.addr %s111, 16
        %s113 = scalar_lea.vmem [#allocation2], %s112
        // Predicated region
        $region25: #{tpu_custom_call.1} parent=23 // pred_check
          %p114 = pneg %p36
        $region26: #{tpu_custom_call.1} parent=23 // pred_check_branch
          %116 = sbr.rel (%p114) target = $region28
        $region27: #{tpu_custom_call.1} parent=23 // pred_region
          %117 = dma.done %s110, 256
        $region28: #{tpu_custom_call.1} parent=23 // pred_fallthru
          _
        %s118 = sand.u32 %s23, 1
        %s119 = scalar_lea.sflag [#allocation3], %s118
        %s120 = sand.u32 %s23, 1
        %s121 = smul.addr %s120, 16
        %s122 = scalar_lea.vmem [#allocation2], %s121
        %p123 = pneg %p36
        %p124 = pneg %p33
        %p125 = pneg %p62
        %p126 = pneg %p59
        %p127 = scmp.lt.s32.totalorder %s15, 7
        %s128 = scalar_select %p127, %s15, 7
        %s129 = smul.addr %s128, 3
        %s130 = smul.addr %s129, 8
        %s131 = scalar_lea.vmem %s1, %s130
        %p132 = scmp.lt.s32.totalorder %s15, 7
        %s133 = scalar_select %p132, %s15, 7
        %s134 = smul.addr %s133, 3
        %s135 = smul.addr %s134, 8
        %s136 = scalar_lea.vmem %s1, %s135
        %v137 = vld [vmem:[%s113] sm:$0xff]
        %v138 = vld [vmem:[%s113 + $0x8] sm:$0xff]
        %141 = vrot.lane.b32.xlu0 %v137, 1
        %v142 = vpop.permute.xlu0 %141
        %143 = vrot.lane.b32.xlu0 %v138, 1
        %v144 = vpop.permute.xlu0 %143
        %vm147 = vcmask 7168
        %v148 = vsel %vm147, 0.0, %v142
        %v149 = vsel %vm147, 0.0, %v144
        %vm150 = vcmask 138240
        %v151 = vsel %vm150, %v148, 0.0
        %v152 = vsel %vm150, %v149, 0.0
        %vm155 = vcmask 1040384
        %v156 = vrot.slane %v151, 7
        %v157 = vrot.slane %v152, 7
        %v158 = vsel %vm155, %v156, %v157
        %v162 = vsel %vm155, 0.0, %v156
        %v163 = vsel %vm155, %v157, 0.0
        %vm164 = vcmask 146432
        %165 = vst.msk [vmem:[%s136] sm:$0xff] %vm164, %v162
        %166 = vst.msk [vmem:[%s136 + $0x8] sm:$0xff] %vm164, %v158
        %vm167 = vcmask 140288
        %168 = vst.msk [vmem:[%s136 + $0x10] sm:$0x3] %vm167, %v163
        %p169 = scmp.lt.s32.totalorder %s15, 7
        %s170 = scalar_select %p169, %s15, 7
        %s171 = smul.addr %s170, 3
        %s172 = smul.addr %s171, 8
        %s173 = scalar_lea.vmem %s1, %s172
        // Predicated region
        $region29: #{tpu_custom_call.1} parent=23 // pred_check
          %p174 = pneg %p59
        $region30: #{tpu_custom_call.1} parent=23 // pred_check_branch
          %176 = sbr.rel (%p174) target = $region32
        $region31: #{tpu_custom_call.1} parent=23 // pred_region
          _
        $region32: #{tpu_custom_call.1} parent=23 // pred_fallthru
          _
      $region24: #{tpu_custom_call.1} parent=5 // pred_fallthru
        _
      %p177 = scmp.le.s32.totalorder 2, %s10
      // Predicated region
      $region33: #{tpu_custom_call.1} parent=5 // pred_check
        %p178 = pneg %p177
      $region34: #{tpu_custom_call.1} parent=5 // pred_check_branch
        %180 = sbr.rel (%p178) target = $region36
      $region35: #{tpu_custom_call.1} parent=5 // pred_region
        %s181 = ssub.s32 %s10, 2
        // Predicated region
        $region37: #{tpu_custom_call.1} parent=35 // pred_check
          %p182 = pneg %p65
        $region38: #{tpu_custom_call.1} parent=35 // pred_check_branch
          %184 = sbr.rel (%p182) target = $region40
        $region39: #{tpu_custom_call.1} parent=35 // pred_region
          %p185 = scmp.lt.s32.totalorder %s16, 7
          %s186 = scalar_select %p185, %s16, 7
          %s187 = smul.addr %s186, 3
          %s188 = smul.addr %s187, 8
          %s189 = scalar_lea.vmem %s1, %s188
        $region40: #{tpu_custom_call.1} parent=35 // pred_fallthru
          _
      $region36: #{tpu_custom_call.1} parent=5 // pred_fallthru
        _
    $region6: #{tpu_custom_call.1} parent=1 // loop_footer
      %s14 = sadd.s32 1, %s10
    $region7: #{tpu_custom_call.1} parent=1 // loop_footer_branch
      %9 = sbr.rel target = $region3
    $region8: #{tpu_custom_call.1} parent=1 // loop_exit
      _
    %190 = vsyncpa [#allocation3], 1
    %s191 = scalar_lea.sflag [#allocation3], 1
    %192 = vsyncpa %s191, 1

</llo_original>
